<compile_context>
chip_gen: v6e
topology: v6e:2x2x1
jax: 0.10.0
libtpu: 0.0.40
codegen_flags: <defaults>
</compile_context>

<pallas_src>
import functools

import jax
import jax.numpy as jnp
from jax.experimental import pallas as pl
from jax.experimental.pallas import tpu as pltpu


def dqn_kernel(x_ref, w1_ref, b1_ref, w2_ref, b2_ref, w3_ref, b3_ref, o_ref):
    # fc1 + ReLU  (bf16 operands, f32 MXU accumulation)
    h1 = jnp.dot(x_ref[...], w1_ref[...], preferred_element_type=jnp.float32)
    h1 = jnp.maximum(h1 + b1_ref[...], 0.0).astype(jnp.bfloat16)
    # fc2 + ReLU
    h2 = jnp.dot(h1, w2_ref[...], preferred_element_type=jnp.float32)
    h2 = jnp.maximum(h2 + b2_ref[...], 0.0).astype(jnp.bfloat16)
    # output (no activation)
    out = jnp.dot(h2, w3_ref[...], preferred_element_type=jnp.float32)
    o_ref[...] = (out + b3_ref[...]).astype(o_ref.dtype)


def _round_up(x, m):
    return ((x + m - 1) // m) * m


@functools.partial(jax.jit, static_argnames=("tb",))
def dqn_forward(x, params, *, tb=128):
    """Fused 3-layer MLP forward. x: [B, state_size] float32 -> [B, action_size] float32."""
    w1, b1, w2, b2, w3, b3 = params
    B, state_size = x.shape
    action_size = w3.shape[1]

    # Lane-dense output: pad N of the last matmul up to a multiple of 128.
    n_out = _round_up(action_size, 128)
    if n_out != action_size:
        w3 = jnp.pad(w3, ((0, 0), (0, n_out - action_size)))
        b3 = jnp.pad(b3, ((0, 0), (0, n_out - action_size)))

    # Batch tile: multiple of 8 sublanes, capped at tb (default 128 = MXU M dim).
    # Pad B up to a multiple of TB so every grid step sees a full tile.
    TB = min(_round_up(tb, 8), _round_up(max(B, 1), 8))
    Bp = _round_up(B, TB)

    xb = x.astype(jnp.bfloat16)
    if Bp != B:
        xb = jnp.pad(xb, ((0, Bp - B), (0, 0)))

    grid = (Bp // TB,)

    # Weights / biases: full-array blocks with a constant index map -> stay
    # VMEM-resident across all batch-grid iterations (single DMA each).
    def resident(a):
        zeros = (0,) * a.ndim
        return pl.BlockSpec(a.shape, lambda i, z=zeros: z)

    out = pl.pallas_call(
        dqn_kernel,
        out_shape=jax.ShapeDtypeStruct((Bp, n_out), jnp.float32),
        grid=grid,
        in_specs=[
            pl.BlockSpec((TB, state_size), lambda i: (i, 0)),
            resident(w1), resident(b1),
            resident(w2), resident(b2),
            resident(w3), resident(b3),
        ],
        out_specs=pl.BlockSpec((TB, n_out), lambda i: (i, 0)),
        compiler_params=pltpu.CompilerParams(
            dimension_semantics=("parallel",),   # megacore batch split on v7x
            vmem_limit_bytes=8 << 20,            # actual footprint < 2 MiB
        ),
    )(xb, w1, b1, w2, b2, w3, b3)

    return out[:B, :action_size]


def init_dqn_params(key, state_size, action_size):
    """Deterministic init mimicking PyTorch nn.Linear default (U(-1/sqrt(in), 1/sqrt(in))).

    Weights are stored [in, out] in bfloat16 (MXU-friendly, halves HBM weight traffic);
    biases are float32 [1, out].
    """
    dims = [(state_size, 512), (512, 256), (256, action_size)]
    params = []
    for i, (fin, fout) in enumerate(dims):
        kw, kb = jax.random.split(jax.random.fold_in(key, i))
        bound = 1.0 / (fin ** 0.5)
        w = jax.random.uniform(kw, (fin, fout), jnp.float32, -bound, bound)
        b = jax.random.uniform(kb, (1, fout), jnp.float32, -bound, bound)
        params += [w.astype(jnp.bfloat16), b]
    return tuple(params)


def dqn_reference(x, params):
    """Plain-JAX reference mirroring the kernel's bf16-operand / f32-accum math."""
    w1, b1, w2, b2, w3, b3 = params
    xb = x.astype(jnp.bfloat16)
    h1 = jnp.maximum(
        jnp.dot(xb, w1, preferred_element_type=jnp.float32) + b1, 0.0
    ).astype(jnp.bfloat16)
    h2 = jnp.maximum(
        jnp.dot(h1, w2, preferred_element_type=jnp.float32) + b2, 0.0
    ).astype(jnp.bfloat16)
    return jnp.dot(h2, w3, preferred_element_type=jnp.float32) + b3


if __name__ == "__main__":
    key = jax.random.PRNGKey(0)
    B, state_size, action_size = 8, 32, 8

    kx, kp = jax.random.split(key)
    x = jax.random.normal(kx, (B, state_size), jnp.float32)
    params = init_dqn_params(kp, state_size, action_size)

    out = jax.block_until_ready(dqn_forward(x, params))

    ref = dqn_reference(x, params)
    assert out.shape == (B, action_size)
    assert out.dtype == jnp.float32
    assert jnp.allclose(out, ref, atol=1e-2, rtol=1e-2), float(
        jnp.max(jnp.abs(out - ref))
    )

    # Also exercise a batch large enough to tile (multiple grid steps + padding path).
    xb = jax.random.normal(jax.random.fold_in(key, 7), (300, state_size), jnp.float32)
    outb = jax.block_until_ready(dqn_forward(xb, params))
    refb = dqn_reference(xb, params)
    assert outb.shape == (300, action_size)
    assert jnp.allclose(outb, refb, atol=1e-2, rtol=1e-2)

    print("KERNEL_OK")
</pallas_src>

<mosaic_0001>
module attributes {stable_mosaic.version = 11 : i64} {
  func.func @dqn_kernel(%arg0: i32, %arg1: memref<8x32xbf16, #tpu.memory_space<vmem>>, %arg2: memref<32x512xbf16, #tpu.memory_space<vmem>>, %arg3: memref<1x512xf32, #tpu.memory_space<vmem>>, %arg4: memref<512x256xbf16, #tpu.memory_space<vmem>>, %arg5: memref<1x256xf32, #tpu.memory_space<vmem>>, %arg6: memref<256x128xbf16, #tpu.memory_space<vmem>>, %arg7: memref<1x128xf32, #tpu.memory_space<vmem>>, %arg8: memref<8x128xf32, #tpu.memory_space<vmem>>) attributes {dimension_semantics = [#tpu.dimension_semantics<parallel>], iteration_bounds = array<i64: 1>, scalar_prefetch = 0 : i64, scratch_operands = 0 : i64, tpu.core_type = #tpu.core_type<tc>, window_params = [{transform_indices = @transform_0, window_bounds = array<i64: 8, 32>}, {pipeline_mode = #tpu.pipeline_mode<synchronous>, transform_indices = @transform_1, window_bounds = array<i64: 32, 512>}, {pipeline_mode = #tpu.pipeline_mode<synchronous>, transform_indices = @transform_2, window_bounds = array<i64: 1, 512>}, {pipeline_mode = #tpu.pipeline_mode<synchronous>, transform_indices = @transform_3, window_bounds = array<i64: 512, 256>}, {pipeline_mode = #tpu.pipeline_mode<synchronous>, transform_indices = @transform_4, window_bounds = array<i64: 1, 256>}, {pipeline_mode = #tpu.pipeline_mode<synchronous>, transform_indices = @transform_5, window_bounds = array<i64: 256, 128>}, {pipeline_mode = #tpu.pipeline_mode<synchronous>, transform_indices = @transform_6, window_bounds = array<i64: 1, 128>}, {transform_indices = @transform_7, window_bounds = array<i64: 8, 128>}]} {
    %c0 = arith.constant 0 : index
    %c0_0 = arith.constant 0 : index
    %0 = vector.load %arg1[%c0, %c0_0] : memref<8x32xbf16, #tpu.memory_space<vmem>>, vector<8x32xbf16>
    %c0_1 = arith.constant 0 : index
    %c0_2 = arith.constant 0 : index
    %1 = vector.load %arg2[%c0_1, %c0_2] : memref<32x512xbf16, #tpu.memory_space<vmem>>, vector<32x512xbf16>
    %cst = arith.constant dense<0.000000e+00> : vector<8x512xf32>
    %2 = tpu.matmul %0, %1, %cst {dimension_numbers = #tpu.dot_dimension_numbers<[1], [0], [0], [1], [0, 0, 1, 1], [], []>} : vector<8x32xbf16>, vector<32x512xbf16>, vector<8x512xf32> -> vector<8x512xf32>
    %c0_3 = arith.constant 0 : index
    %c0_4 = arith.constant 0 : index
    %3 = vector.load %arg3[%c0_3, %c0_4] : memref<1x512xf32, #tpu.memory_space<vmem>>, vector<1x512xf32>
    %4 = vector.broadcast %3 : vector<1x512xf32> to vector<8x512xf32>
    %5 = arith.addf %2, %4 : vector<8x512xf32>
    %cst_5 = arith.constant 0.000000e+00 : f32
    %6 = vector.broadcast %cst_5 : f32 to vector<8x512xf32>
    %7 = arith.maximumf %5, %6 : vector<8x512xf32>
    %8 = arith.truncf %7 : vector<8x512xf32> to vector<8x512xbf16>
    %c0_6 = arith.constant 0 : index
    %c0_7 = arith.constant 0 : index
    %9 = vector.load %arg4[%c0_6, %c0_7] : memref<512x256xbf16, #tpu.memory_space<vmem>>, vector<512x256xbf16>
    %cst_8 = arith.constant dense<0.000000e+00> : vector<8x256xf32>
    %10 = tpu.matmul %8, %9, %cst_8 {dimension_numbers = #tpu.dot_dimension_numbers<[1], [0], [0], [1], [0, 0, 1, 1], [], []>} : vector<8x512xbf16>, vector<512x256xbf16>, vector<8x256xf32> -> vector<8x256xf32>
    %c0_9 = arith.constant 0 : index
    %c0_10 = arith.constant 0 : index
    %11 = vector.load %arg5[%c0_9, %c0_10] : memref<1x256xf32, #tpu.memory_space<vmem>>, vector<1x256xf32>
    %12 = vector.broadcast %11 : vector<1x256xf32> to vector<8x256xf32>
    %13 = arith.addf %10, %12 : vector<8x256xf32>
    %cst_11 = arith.constant 0.000000e+00 : f32
    %14 = vector.broadcast %cst_11 : f32 to vector<8x256xf32>
    %15 = arith.maximumf %13, %14 : vector<8x256xf32>
    %16 = arith.truncf %15 : vector<8x256xf32> to vector<8x256xbf16>
    %c0_12 = arith.constant 0 : index
    %c0_13 = arith.constant 0 : index
    %17 = vector.load %arg6[%c0_12, %c0_13] : memref<256x128xbf16, #tpu.memory_space<vmem>>, vector<256x128xbf16>
    %cst_14 = arith.constant dense<0.000000e+00> : vector<8x128xf32>
    %18 = tpu.matmul %16, %17, %cst_14 {dimension_numbers = #tpu.dot_dimension_numbers<[1], [0], [0], [1], [0, 0, 1, 1], [], []>} : vector<8x256xbf16>, vector<256x128xbf16>, vector<8x128xf32> -> vector<8x128xf32>
    %c0_15 = arith.constant 0 : index
    %c0_16 = arith.constant 0 : index
    %19 = vector.load %arg7[%c0_15, %c0_16] : memref<1x128xf32, #tpu.memory_space<vmem>>, vector<1x128xf32>
    %20 = vector.broadcast %19 : vector<1x128xf32> to vector<8x128xf32>
    %21 = arith.addf %18, %20 : vector<8x128xf32>
    %c0_17 = arith.constant 0 : index
    %c0_18 = arith.constant 0 : index
    %22 = vector.load %arg8[%c0_17, %c0_18] : memref<8x128xf32, #tpu.memory_space<vmem>>, vector<8x128xf32>
    tpu.vector_store %arg8[%c0_17, %c0_18], %21 {strides = array<i32>} : memref<8x128xf32, #tpu.memory_space<vmem>>, vector<8x128xf32>,
    return
  }
  func.func @transform_0(%arg0: i32) -> (i32, i32) {
    %c0_i32 = arith.constant 0 : i32
    %c0_i32_0 = arith.constant 0 : i32
    return %arg0, %c0_i32 : i32, i32
  }
  func.func @transform_1(%arg0: i32) -> (i32, i32) {
    %c0_i32 = arith.constant 0 : i32
    %c0_i32_0 = arith.constant 0 : i32
    %c0_i32_1 = arith.constant 0 : i32
    return %c0_i32, %c0_i32_0 : i32, i32
  }
  func.func @transform_2(%arg0: i32) -> (i32, i32) {
    %c0_i32 = arith.constant 0 : i32
    %c0_i32_0 = arith.constant 0 : i32
    %c0_i32_1 = arith.constant 0 : i32
    return %c0_i32, %c0_i32_0 : i32, i32
  }
  func.func @transform_3(%arg0: i32) -> (i32, i32) {
    %c0_i32 = arith.constant 0 : i32
    %c0_i32_0 = arith.constant 0 : i32
    %c0_i32_1 = arith.constant 0 : i32
    return %c0_i32, %c0_i32_0 : i32, i32
  }
  func.func @transform_4(%arg0: i32) -> (i32, i32) {
    %c0_i32 = arith.constant 0 : i32
    %c0_i32_0 = arith.constant 0 : i32
    %c0_i32_1 = arith.constant 0 : i32
    return %c0_i32, %c0_i32_0 : i32, i32
  }
  func.func @transform_5(%arg0: i32) -> (i32, i32) {
    %c0_i32 = arith.constant 0 : i32
    %c0_i32_0 = arith.constant 0 : i32
    %c0_i32_1 = arith.constant 0 : i32
    return %c0_i32, %c0_i32_0 : i32, i32
  }
  func.func @transform_6(%arg0: i32) -> (i32, i32) {
    %c0_i32 = arith.constant 0 : i32
    %c0_i32_0 = arith.constant 0 : i32
    %c0_i32_1 = arith.constant 0 : i32
    return %c0_i32, %c0_i32_0 : i32, i32
  }
  func.func @transform_7(%arg0: i32) -> (i32, i32) {
    %c0_i32 = arith.constant 0 : i32
    %c0_i32_0 = arith.constant 0 : i32
    return %arg0, %c0_i32 : i32, i32
  }
}

</mosaic_0001>

<llo_original>
// kernel: dqn_forward.1
$region0: #{dqn_forward.1}
  #allocation0 [shape = 'u32[]', space=smem, size = 0x4, offset = 0x4, fixed_abs, tag = 'smem constant byte address 0x4 - core index']
  #allocation1 [shape = 'u32[144,128]{1,0:T(1,128)}', space=vmem, size = 0x12000, scoped, tag = 'internal scratch']
  %s0 = inlined_call_operand.vmem [shape: bf16[8,32], index: 0, kind: input, shape index: {}]
  %s1 = inlined_call_operand.vmem [shape: bf16[32,512], index: 1, kind: input, shape index: {}]
  %s2 = inlined_call_operand.vmem [shape: f32[1,512], index: 2, kind: input, shape index: {}]
  %s3 = inlined_call_operand.hbm [shape: bf16[512,256], index: 3, kind: input, shape index: {}]
  %s4 = inlined_call_operand.vmem [shape: f32[1,256], index: 4, kind: input, shape index: {}]
  %s5 = inlined_call_operand.vmem [shape: bf16[256,128], index: 5, kind: input, shape index: {}]
  %s6 = inlined_call_operand.vmem [shape: f32[1,128], index: 6, kind: input, shape index: {}]
  %s7 = inlined_call_operand.hbm [shape: f32[8,128], index: 7, kind: output, shape index: {}]
  %s8 = sld [smem:[#allocation0]]
  $region42: #{dqn_forward.1} parent=0
    _
  %s10 = ssub.s32 1, %s8
  %s11 = scalar_select 0, %s10, %s8
  $region1: #{dqn_forward.1} parent=0
    #allocation2 [shape = 'u8[262144]{0}', space=vmem, size = 0x40000, scoped, tag = 'input window, operand 3, single buffered']
    #allocation3 [shape = 's32[1]{0}', space=sflag, size = 0x4, scoped, tag = 'scoped memory for dqn_forward.1']
    #allocation4 [shape = 's32[1]{0}', space=sflag, size = 0x4, scoped, tag = 'scoped memory for dqn_forward.1']
    #allocation5 [shape = 'u8[4096]{0}', space=vmem, size = 0x1000, scoped, tag = 'output window, operand 0, single buffered']
    %12 = vsyncpa [#allocation3], 0
    %13 = vsyncpa [#allocation4], 0
    // Predicated region
    $region2: #{dqn_forward.1} parent=1 // pred_check
      _
    $region3: #{dqn_forward.1} parent=1 // pred_check_branch
      %15 = sbr.rel (0) target = $region5
    $region4: #{dqn_forward.1} parent=1 // pred_region
      _
    $region5: #{dqn_forward.1} parent=1 // pred_fallthru
      _
    // Predicated region
    $region6: #{dqn_forward.1} parent=1 // pred_check
      _
    $region7: #{dqn_forward.1} parent=1 // pred_check_branch
      %17 = sbr.rel (0) target = $region9
    $region8: #{dqn_forward.1} parent=1 // pred_region
      _
    $region9: #{dqn_forward.1} parent=1 // pred_fallthru
      _
    // Predicated region
    $region10: #{dqn_forward.1} parent=1 // pred_check
      _
    $region11: #{dqn_forward.1} parent=1 // pred_check_branch
      %19 = sbr.rel (0) target = $region13
    $region12: #{dqn_forward.1} parent=1 // pred_region
      _
    $region13: #{dqn_forward.1} parent=1 // pred_fallthru
      _
    // Predicated region
    $region14: #{dqn_forward.1} parent=1 // pred_check
      _
    $region15: #{dqn_forward.1} parent=1 // pred_check_branch
      %21 = sbr.rel (0) target = $region17
    $region16: #{dqn_forward.1} parent=1 // pred_region
      %s23 = ssub.s32 8192, 8192
      %24 = vsyncadd [#allocation3], %s23
      %s25 = sshll.u32 [#allocation2], 4
      %s26 = int_to_ptr.vmem [resolvable:$true] %s25
      %31 = dma.hbm_to_vmem [thread:$0]  %s3, 8192, %s26, [#allocation3], 128, 128, 8
    $region17: #{dqn_forward.1} parent=1 // pred_fallthru
      _
    // Predicated region
    $region18: #{dqn_forward.1} parent=1 // pred_check
      _
    $region19: #{dqn_forward.1} parent=1 // pred_check_branch
      %33 = sbr.rel (0) target = $region21
    $region20: #{dqn_forward.1} parent=1 // pred_region
      _
    $region21: #{dqn_forward.1} parent=1 // pred_fallthru
      _
    // Predicated region
    $region22: #{dqn_forward.1} parent=1 // pred_check
      _
    $region23: #{dqn_forward.1} parent=1 // pred_check_branch
      %35 = sbr.rel (0) target = $region25
    $region24: #{dqn_forward.1} parent=1 // pred_region
      _
    $region25: #{dqn_forward.1} parent=1 // pred_fallthru
      _
    // Predicated region
    $region26: #{dqn_forward.1} parent=1 // pred_check
      _
    $region27: #{dqn_forward.1} parent=1 // pred_check_branch
      %37 = sbr.rel (0) target = $region29
    $region28: #{dqn_forward.1} parent=1 // pred_region
      _
    $region29: #{dqn_forward.1} parent=1 // pred_fallthru
      _
    // Predicated region
    $region30: #{dqn_forward.1} parent=1 // pred_check
      _
    $region31: #{dqn_forward.1} parent=1 // pred_check_branch
      %39 = sbr.rel (0) target = $region33
    $region32: #{dqn_forward.1} parent=1 // pred_region
      %40 = dma.done [#allocation3], 8192
    $region33: #{dqn_forward.1} parent=1 // pred_fallthru
      _
    %v42 = vld [vmem:[%s0] sm:$0xf]
    %v43 = vld [vmem:[%s1] sm:$0xff]
    %v44 = vld [vmem:[%s1 + $0x8] sm:$0xff]
    %v45 = vld [vmem:[%s1 + $0x10] sm:$0xff]
    %v46 = vld [vmem:[%s1 + $0x18] sm:$0xff]
    %v47 = vld [vmem:[%s1 + $0x20] sm:$0xff]
    %v48 = vld [vmem:[%s1 + $0x28] sm:$0xff]
    %v49 = vld [vmem:[%s1 + $0x30] sm:$0xff]
    %v50 = vld [vmem:[%s1 + $0x38] sm:$0xff]
    %v51 = vld [vmem:[%s2] sm:$0xf]
    %v53 = vlaneseq
    %v54 = vshrl.u32 %v53, 7
    %v55 = vsub.s32 0, %v54
    %v56 = vrot.slane %v51, %v55
    %v57 = vlaneseq
    %v58 = vshrl.u32 %v57, 7
    %v59 = vsub.s32 1, %v58
    %v60 = vrot.slane %v51, %v59
    %v61 = vlaneseq
    %v62 = vshrl.u32 %v61, 7
    %v63 = vsub.s32 2, %v62
    %v64 = vrot.slane %v51, %v63
    %v65 = vlaneseq
    %v66 = vshrl.u32 %v65, 7
    %v67 = vsub.s32 3, %v66
    %v68 = vrot.slane %v51, %v67
    %v81 = vunpack.c.l.b16 %v43
    %v82 = vunpack.c.h.b16 %v43
    %v83 = vunpack.c.l.b16 %v44
    %v84 = vunpack.c.h.b16 %v44
    %v85 = vunpack.c.l.b16 %v45
    %v86 = vunpack.c.h.b16 %v45
    %v87 = vunpack.c.l.b16 %v46
    %v88 = vunpack.c.h.b16 %v46
    %v89 = vunpack.c.l.b16 %v47
    %v90 = vunpack.c.h.b16 %v47
    %v91 = vunpack.c.l.b16 %v48
    %v92 = vunpack.c.h.b16 %v48
    %v93 = vunpack.c.l.b16 %v49
    %v94 = vunpack.c.h.b16 %v49
    %v95 = vunpack.c.l.b16 %v50
    %v96 = vunpack.c.h.b16 %v50
    %v97 = vpack.c.b16 %v85, %v81
    %v98 = vpack.c.b16 %v86, %v82
    %v99 = vpack.c.b16 %v87, %v83
    %v100 = vpack.c.b16 %v88, %v84
    %v101 = vpack.c.b16 %v93, %v89
    %v102 = vpack.c.b16 %v94, %v90
    %v103 = vpack.c.b16 %v95, %v91
    %v104 = vpack.c.b16 %v96, %v92
    %vm113 = vcmask 261120
    %v115 = vsel %vm113, %v42, 0
    %117 = vmatprep.subr.bf16.mxu0 0
    %118 = vmatpush1.bf16.msra.mxu0 0
    %119 = vmatprep.subr.bf16.mxu0 0
    %120 = vmatpush1.bf16.msra.mxu0 0
    %121 = vmatprep.subr.bf16.mxu0 0
    %122 = vmatpush1.bf16.msra.mxu0 0
    %123 = vmatprep.subr.bf16.mxu0 0
    %124 = vmatpush1.bf16.msra.mxu0 0
    %125 = vmatprep.subr.bf16.mxu0 0
    %126 = vmatpush1.bf16.msra.mxu0 0
    %127 = vmatprep.subr.bf16.mxu0 0
    %128 = vmatpush1.bf16.msra.mxu0 0
    %129 = vmatprep.subr.bf16.mxu0 %v102
    %130 = vmatpush1.bf16.msra.mxu0 %v101
    %131 = vmatprep.subr.bf16.mxu0 %v98
    %132 = vmatpush1.bf16.msra.mxu0 %v97
    %133 = vmatprep.subr.bf16.mxu0 0
    %134 = vmatpush2.bf16.msra.mxu0 0
    %135 = vmatprep.subr.bf16.mxu0 0
    %136 = vmatpush2.bf16.msra.mxu0 0
    %137 = vmatprep.subr.bf16.mxu0 0
    %138 = vmatpush2.bf16.msra.mxu0 0
    %139 = vmatprep.subr.bf16.mxu0 0
    %140 = vmatpush2.bf16.msra.mxu0 0
    %141 = vmatprep.subr.bf16.mxu0 0
    %142 = vmatpush2.bf16.msra.mxu0 0
    %143 = vmatprep.subr.bf16.mxu0 0
    %144 = vmatpush2.bf16.msra.mxu0 0
    %145 = vmatprep.subr.bf16.mxu0 0
    %146 = vmatpush2.bf16.msra.mxu0 0
    %147 = vmatprep.subr.bf16.mxu0 0
    %148 = vmatpush2.bf16.msra.mxu0 0
    %149 = vmatprep.mubr.bf16.mxu0 0
    %150 = vmatmul.mubr.bf16.gmra.mxu0 %v115
    %v151 = vpop.f32.mrf.mxu0
    %v152 = vadd.f32 %v56, %v151
    %v153 = vpop.f32.mrf.mxu0
    %v154 = vadd.f32 %v60, %v153
    %v155 = vpop.f32.mrf.mxu0
    %v156 = vpop.f32.mrf.mxu0
    %157 = vdwg.mxu0
    %158 = vmatprep.subr.bf16.mxu0 0
    %159 = vmatpush1.bf16.msra.mxu0 0
    %160 = vmatprep.subr.bf16.mxu0 0
    %161 = vmatpush1.bf16.msra.mxu0 0
    %162 = vmatprep.subr.bf16.mxu0 0
    %163 = vmatpush1.bf16.msra.mxu0 0
    %164 = vmatprep.subr.bf16.mxu0 0
    %165 = vmatpush1.bf16.msra.mxu0 0
    %166 = vmatprep.subr.bf16.mxu0 0
    %167 = vmatpush1.bf16.msra.mxu0 0
    %168 = vmatprep.subr.bf16.mxu0 0
    %169 = vmatpush1.bf16.msra.mxu0 0
    %170 = vmatprep.subr.bf16.mxu0 %v104
    %171 = vmatpush1.bf16.msra.mxu0 %v103
    %172 = vmatprep.subr.bf16.mxu0 %v100
    %173 = vmatpush1.bf16.msra.mxu0 %v99
    %174 = vmatprep.subr.bf16.mxu0 0
    %175 = vmatpush2.bf16.msra.mxu0 0
    %176 = vmatprep.subr.bf16.mxu0 0
    %177 = vmatpush2.bf16.msra.mxu0 0
    %178 = vmatprep.subr.bf16.mxu0 0
    %179 = vmatpush2.bf16.msra.mxu0 0
    %180 = vmatprep.subr.bf16.mxu0 0
    %181 = vmatpush2.bf16.msra.mxu0 0
    %182 = vmatprep.subr.bf16.mxu0 0
    %183 = vmatpush2.bf16.msra.mxu0 0
    %184 = vmatprep.subr.bf16.mxu0 0
    %185 = vmatpush2.bf16.msra.mxu0 0
    %186 = vmatprep.subr.bf16.mxu0 0
    %187 = vmatpush2.bf16.msra.mxu0 0
    %188 = vmatprep.subr.bf16.mxu0 0
    %189 = vmatpush2.bf16.msra.mxu0 0
    %190 = vmatprep.mubr.bf16.mxu0 0
    %191 = vmatmul.mubr.bf16.gmra.mxu0 %v115
    %v192 = vpop.f32.mrf.mxu0
    %v193 = vadd.f32 %v64, %v192
    %v194 = vpop.f32.mrf.mxu0
    %v195 = vadd.f32 %v68, %v194
    %v196 = vpop.f32.mrf.mxu0
    %v197 = vpop.f32.mrf.mxu0
    %198 = vdwg.mxu0
    %v199 = vmax.f32 %v152, 0.0
    %v200 = vmax.f32 %v154, 0.0
    %v201 = vmax.f32 %v193, 0.0
    %v202 = vmax.f32 %v195, 0.0
    %v203 = vpack.c.bf16 %v199, %v199
    %v204 = vpack.c.bf16 %v200, %v200
    %v205 = vpack.c.bf16 %v201, %v201
    %v206 = vpack.c.bf16 %v202, %v202
    %v207 = vld [vmem:[#allocation2] sm:$0xff]
    %v208 = vld [vmem:[#allocation2 + $0x8] sm:$0xff]
    %v209 = vld [vmem:[#allocation2 + $0x10] sm:$0xff]
    %v210 = vld [vmem:[#allocation2 + $0x18] sm:$0xff]
    %v211 = vld [vmem:[#allocation2 + $0x20] sm:$0xff]
    %v212 = vld [vmem:[#allocation2 + $0x28] sm:$0xff]
    %v213 = vld [vmem:[#allocation2 + $0x30] sm:$0xff]
    %v214 = vld [vmem:[#allocation2 + $0x38] sm:$0xff]
    %v215 = vld [vmem:[#allocation2 + $0x40] sm:$0xff]
    %v216 = vld [vmem:[#allocation2 + $0x48] sm:$0xff]
    %v217 = vld [vmem:[#allocation2 + $0x50] sm:$0xff]
    %v218 = vld [vmem:[#allocation2 + $0x58] sm:$0xff]
    %v219 = vld [vmem:[#allocation2 + $0x60] sm:$0xff]
    %v220 = vld [vmem:[#allocation2 + $0x68] sm:$0xff]
    %v221 = vld [vmem:[#allocation2 + $0x70] sm:$0xff]
    %v222 = vld [vmem:[#allocation2 + $0x78] sm:$0xff]
    %v223 = vld [vmem:[#allocation2 + $0x80] sm:$0xff]
    %v224 = vld [vmem:[#allocation2 + $0x88] sm:$0xff]
    %v225 = vld [vmem:[#allocation2 + $0x90] sm:$0xff]
    %v226 = vld [vmem:[#allocation2 + $0x98] sm:$0xff]
    %v227 = vld [vmem:[#allocation2 + $0xa0] sm:$0xff]
    %v228 = vld [vmem:[#allocation2 + $0xa8] sm:$0xff]
    %v229 = vld [vmem:[#allocation2 + $0xb0] sm:$0xff]
    %v230 = vld [vmem:[#allocation2 + $0xb8] sm:$0xff]
    %v231 = vld [vmem:[#allocation2 + $0xc0] sm:$0xff]
    %v232 = vld [vmem:[#allocation2 + $0xc8] sm:$0xff]
    %v233 = vld [vmem:[#allocation2 + $0xd0] sm:$0xff]
    %v234 = vld [vmem:[#allocation2 + $0xd8] sm:$0xff]
    %v235 = vld [vmem:[#allocation2 + $0xe0] sm:$0xff]
    %v236 = vld [vmem:[#allocation2 + $0xe8] sm:$0xff]
    %v237 = vld [vmem:[#allocation2 + $0xf0] sm:$0xff]
    %v238 = vld [vmem:[#allocation2 + $0xf8] sm:$0xff]
    %v239 = vld [vmem:[#allocation2 + $0x100] sm:$0xff]
    %v240 = vld [vmem:[#allocation2 + $0x108] sm:$0xff]
    %v241 = vld [vmem:[#allocation2 + $0x110] sm:$0xff]
    %v242 = vld [vmem:[#allocation2 + $0x118] sm:$0xff]
    %v243 = vld [vmem:[#allocation2 + $0x120] sm:$0xff]
    %v244 = vld [vmem:[#allocation2 + $0x128] sm:$0xff]
    %v245 = vld [vmem:[#allocation2 + $0x130] sm:$0xff]
    %v246 = vld [vmem:[#allocation2 + $0x138] sm:$0xff]
    %v247 = vld [vmem:[#allocation2 + $0x140] sm:$0xff]
    %v248 = vld [vmem:[#allocation2 + $0x148] sm:$0xff]
    %v249 = vld [vmem:[#allocation2 + $0x150] sm:$0xff]
    %v250 = vld [vmem:[#allocation2 + $0x158] sm:$0xff]
    %v251 = vld [vmem:[#allocation2 + $0x160] sm:$0xff]
    %v252 = vld [vmem:[#allocation2 + $0x168] sm:$0xff]
    %v253 = vld [vmem:[#allocation2 + $0x170] sm:$0xff]
    %v254 = vld [vmem:[#allocation2 + $0x178] sm:$0xff]
    %v255 = vld [vmem:[#allocation2 + $0x180] sm:$0xff]
    %v256 = vld [vmem:[#allocation2 + $0x188] sm:$0xff]
    %v257 = vld [vmem:[#allocation2 + $0x190] sm:$0xff]
    %v258 = vld [vmem:[#allocation2 + $0x198] sm:$0xff]
    %v259 = vld [vmem:[#allocation2 + $0x1a0] sm:$0xff]
    %v260 = vld [vmem:[#allocation2 + $0x1a8] sm:$0xff]
    %v261 = vld [vmem:[#allocation2 + $0x1b0] sm:$0xff]
    %v262 = vld [vmem:[#allocation2 + $0x1b8] sm:$0xff]
    %v263 = vld [vmem:[#allocation2 + $0x1c0] sm:$0xff]
    %v264 = vld [vmem:[#allocation2 + $0x1c8] sm:$0xff]
    %v265 = vld [vmem:[#allocation2 + $0x1d0] sm:$0xff]
    %v266 = vld [vmem:[#allocation2 + $0x1d8] sm:$0xff]
    %v267 = vld [vmem:[#allocation2 + $0x1e0] sm:$0xff]
    %v268 = vld [vmem:[#allocation2 + $0x1e8] sm:$0xff]
    %v269 = vld [vmem:[#allocation2 + $0x1f0] sm:$0xff]
    %v270 = vld [vmem:[#allocation2 + $0x1f8] sm:$0xff]
    %v271 = vld [vmem:[%s4] sm:$0x3]
    %v273 = vlaneseq
    %v274 = vshrl.u32 %v273, 7
    %v275 = vsub.s32 0, %v274
    %v276 = vrot.slane %v271, %v275
    %v277 = vlaneseq
    %v278 = vshrl.u32 %v277, 7
    %v279 = vsub.s32 1, %v278
    %v280 = vrot.slane %v271, %v279
    %v347 = vunpack.c.l.b16 %v207
    %v348 = vunpack.c.h.b16 %v207
    %v349 = vunpack.c.l.b16 %v208
    %v350 = vunpack.c.h.b16 %v208
    %v351 = vunpack.c.l.b16 %v209
    %v352 = vunpack.c.h.b16 %v209
    %v353 = vunpack.c.l.b16 %v210
    %v354 = vunpack.c.h.b16 %v210
    %v355 = vunpack.c.l.b16 %v211
    %v356 = vunpack.c.h.b16 %v211
    %v357 = vunpack.c.l.b16 %v212
    %v358 = vunpack.c.h.b16 %v212
    %v359 = vunpack.c.l.b16 %v213
    %v360 = vunpack.c.h.b16 %v213
    %v361 = vunpack.c.l.b16 %v214
    %v362 = vunpack.c.h.b16 %v214
    %v363 = vunpack.c.l.b16 %v215
    %v364 = vunpack.c.h.b16 %v215
    %v365 = vunpack.c.l.b16 %v216
    %v366 = vunpack.c.h.b16 %v216
    %v367 = vunpack.c.l.b16 %v217
    %v368 = vunpack.c.h.b16 %v217
    %v369 = vunpack.c.l.b16 %v218
    %v370 = vunpack.c.h.b16 %v218
    %v371 = vunpack.c.l.b16 %v219
    %v372 = vunpack.c.h.b16 %v219
    %v373 = vunpack.c.l.b16 %v220
    %v374 = vunpack.c.h.b16 %v220
    %v375 = vunpack.c.l.b16 %v221
    %v376 = vunpack.c.h.b16 %v221
    %v377 = vunpack.c.l.b16 %v222
    %v378 = vunpack.c.h.b16 %v222
    %v379 = vunpack.c.l.b16 %v223
    %v380 = vunpack.c.h.b16 %v223
    %v381 = vunpack.c.l.b16 %v224
    %v382 = vunpack.c.h.b16 %v224
    %v383 = vunpack.c.l.b16 %v225
    %v384 = vunpack.c.h.b16 %v225
    %v385 = vunpack.c.l.b16 %v226
    %v386 = vunpack.c.h.b16 %v226
    %v387 = vunpack.c.l.b16 %v227
    %v388 = vunpack.c.h.b16 %v227
    %v389 = vunpack.c.l.b16 %v228
    %v390 = vunpack.c.h.b16 %v228
    %v391 = vunpack.c.l.b16 %v229
    %v392 = vunpack.c.h.b16 %v229
    %v393 = vunpack.c.l.b16 %v230
    %v394 = vunpack.c.h.b16 %v230
    %v395 = vunpack.c.l.b16 %v231
    %v396 = vunpack.c.h.b16 %v231
    %v397 = vunpack.c.l.b16 %v232
    %v398 = vunpack.c.h.b16 %v232
    %v399 = vunpack.c.l.b16 %v233
    %v400 = vunpack.c.h.b16 %v233
    %v401 = vunpack.c.l.b16 %v234
    %v402 = vunpack.c.h.b16 %v234
    %v403 = vunpack.c.l.b16 %v235
    %v404 = vunpack.c.h.b16 %v235
    %v405 = vunpack.c.l.b16 %v236
    %v406 = vunpack.c.h.b16 %v236
    %v407 = vunpack.c.l.b16 %v237
    %v408 = vunpack.c.h.b16 %v237
    %v409 = vunpack.c.l.b16 %v238
    %v410 = vunpack.c.h.b16 %v238
    %v411 = vunpack.c.l.b16 %v239
    %v412 = vunpack.c.h.b16 %v239
    %v413 = vunpack.c.l.b16 %v240
    %v414 = vunpack.c.h.b16 %v240
    %v415 = vunpack.c.l.b16 %v241
    %v416 = vunpack.c.h.b16 %v241
    %v417 = vunpack.c.l.b16 %v242
    %v418 = vunpack.c.h.b16 %v242
    %v419 = vunpack.c.l.b16 %v243
    %v420 = vunpack.c.h.b16 %v243
    %v421 = vunpack.c.l.b16 %v244
    %v422 = vunpack.c.h.b16 %v244
    %v423 = vunpack.c.l.b16 %v245
    %v424 = vunpack.c.h.b16 %v245
    %v425 = vunpack.c.l.b16 %v246
    %v426 = vunpack.c.h.b16 %v246
    %v427 = vunpack.c.l.b16 %v247
    %v428 = vunpack.c.h.b16 %v247
    %v429 = vunpack.c.l.b16 %v248
    %v430 = vunpack.c.h.b16 %v248
    %v431 = vunpack.c.l.b16 %v249
    %v432 = vunpack.c.h.b16 %v249
    %v433 = vunpack.c.l.b16 %v250
    %v434 = vunpack.c.h.b16 %v250
    %v435 = vunpack.c.l.b16 %v251
    %v436 = vunpack.c.h.b16 %v251
    %v437 = vunpack.c.l.b16 %v252
    %v438 = vunpack.c.h.b16 %v252
    %v439 = vunpack.c.l.b16 %v253
    %v440 = vunpack.c.h.b16 %v253
    %v441 = vunpack.c.l.b16 %v254
    %v442 = vunpack.c.h.b16 %v254
    %v443 = vunpack.c.l.b16 %v255
    %v444 = vunpack.c.h.b16 %v255
    %v445 = vunpack.c.l.b16 %v256
    %v446 = vunpack.c.h.b16 %v256
    %v447 = vunpack.c.l.b16 %v257
    %v448 = vunpack.c.h.b16 %v257
    %v449 = vunpack.c.l.b16 %v258
    %v450 = vunpack.c.h.b16 %v258
    %v451 = vunpack.c.l.b16 %v259
    %v452 = vunpack.c.h.b16 %v259
    %v453 = vunpack.c.l.b16 %v260
    %v454 = vunpack.c.h.b16 %v260
    %v455 = vunpack.c.l.b16 %v261
    %v456 = vunpack.c.h.b16 %v261
    %v457 = vunpack.c.l.b16 %v262
    %v458 = vunpack.c.h.b16 %v262
    %v459 = vunpack.c.l.b16 %v263
    %v460 = vunpack.c.h.b16 %v263
    %v461 = vunpack.c.l.b16 %v264
    %v462 = vunpack.c.h.b16 %v264
    %v463 = vunpack.c.l.b16 %v265
    %v464 = vunpack.c.h.b16 %v265
    %v465 = vunpack.c.l.b16 %v266
    %v466 = vunpack.c.h.b16 %v266
    %v467 = vunpack.c.l.b16 %v267
    %v468 = vunpack.c.h.b16 %v267
    %v469 = vunpack.c.l.b16 %v268
    %v470 = vunpack.c.h.b16 %v268
    %v471 = vunpack.c.l.b16 %v269
    %v472 = vunpack.c.h.b16 %v269
    %v473 = vunpack.c.l.b16 %v270
    %v474 = vunpack.c.h.b16 %v270
    %v475 = vpack.c.b16 %v349, %v347
    %v476 = vpack.c.b16 %v350, %v348
    %v477 = vpack.c.b16 %v353, %v351
    %v478 = vpack.c.b16 %v354, %v352
    %v479 = vpack.c.b16 %v357, %v355
    %v480 = vpack.c.b16 %v358, %v356
    %v481 = vpack.c.b16 %v361, %v359
    %v482 = vpack.c.b16 %v362, %v360
    %v483 = vpack.c.b16 %v365, %v363
    %v484 = vpack.c.b16 %v366, %v364
    %v485 = vpack.c.b16 %v369, %v367
    %v486 = vpack.c.b16 %v370, %v368
    %v487 = vpack.c.b16 %v373, %v371
    %v488 = vpack.c.b16 %v374, %v372
    %v489 = vpack.c.b16 %v377, %v375
    %v490 = vpack.c.b16 %v378, %v376
    %v491 = vpack.c.b16 %v381, %v379
    %v492 = vpack.c.b16 %v382, %v380
    %v493 = vpack.c.b16 %v385, %v383
    %v494 = vpack.c.b16 %v386, %v384
    %v495 = vpack.c.b16 %v389, %v387
    %v496 = vpack.c.b16 %v390, %v388
    %v497 = vpack.c.b16 %v393, %v391
    %v498 = vpack.c.b16 %v394, %v392
    %v499 = vpack.c.b16 %v397, %v395
    %v500 = vpack.c.b16 %v398, %v396
    %v501 = vpack.c.b16 %v401, %v399
    %v502 = vpack.c.b16 %v402, %v400
    %v503 = vpack.c.b16 %v405, %v403
    %v504 = vpack.c.b16 %v406, %v404
    %v505 = vpack.c.b16 %v409, %v407
    %v506 = vpack.c.b16 %v410, %v408
    %v507 = vpack.c.b16 %v413, %v411
    %v508 = vpack.c.b16 %v414, %v412
    %v509 = vpack.c.b16 %v417, %v415
    %v510 = vpack.c.b16 %v418, %v416
    %v511 = vpack.c.b16 %v421, %v419
    %v512 = vpack.c.b16 %v422, %v420
    %v513 = vpack.c.b16 %v425, %v423
    %v514 = vpack.c.b16 %v426, %v424
    %v515 = vpack.c.b16 %v429, %v427
    %v516 = vpack.c.b16 %v430, %v428
    %v517 = vpack.c.b16 %v433, %v431
    %v518 = vpack.c.b16 %v434, %v432
    %v519 = vpack.c.b16 %v437, %v435
    %v520 = vpack.c.b16 %v438, %v436
    %v521 = vpack.c.b16 %v441, %v439
    %v522 = vpack.c.b16 %v442, %v440
    %v523 = vpack.c.b16 %v445, %v443
    %v524 = vpack.c.b16 %v446, %v444
    %v525 = vpack.c.b16 %v449, %v447
    %v526 = vpack.c.b16 %v450, %v448
    %v527 = vpack.c.b16 %v453, %v451
    %v528 = vpack.c.b16 %v454, %v452
    %v529 = vpack.c.b16 %v457, %v455
    %v530 = vpack.c.b16 %v458, %v456
    %v531 = vpack.c.b16 %v461, %v459
    %v532 = vpack.c.b16 %v462, %v460
    %v533 = vpack.c.b16 %v465, %v463
    %v534 = vpack.c.b16 %v466, %v464
    %v535 = vpack.c.b16 %v469, %v467
    %v536 = vpack.c.b16 %v470, %v468
    %v537 = vpack.c.b16 %v473, %v471
    %v538 = vpack.c.b16 %v474, %v472
    %603 = vmatprep.subr.bf16.mxu0 %v490
    %604 = vmatpush1.bf16.msra.mxu0 %v489
    %605 = vmatprep.subr.bf16.mxu0 %v488
    %606 = vmatpush1.bf16.msra.mxu0 %v487
    %607 = vmatprep.subr.bf16.mxu0 %v486
    %608 = vmatpush1.bf16.msra.mxu0 %v485
    %609 = vmatprep.subr.bf16.mxu0 %v484
    %610 = vmatpush1.bf16.msra.mxu0 %v483
    %611 = vmatprep.subr.bf16.mxu0 %v482
    %612 = vmatpush1.bf16.msra.mxu0 %v481
    %613 = vmatprep.subr.bf16.mxu0 %v480
    %614 = vmatpush1.bf16.msra.mxu0 %v479
    %615 = vmatprep.subr.bf16.mxu0 %v478
    %616 = vmatpush1.bf16.msra.mxu0 %v477
    %617 = vmatprep.subr.bf16.mxu0 %v476
    %618 = vmatpush1.bf16.msra.mxu0 %v475
    %619 = vmatprep.subr.bf16.mxu0 %v506
    %620 = vmatpush2.bf16.msra.mxu0 %v505
    %621 = vmatprep.subr.bf16.mxu0 %v504
    %622 = vmatpush2.bf16.msra.mxu0 %v503
    %623 = vmatprep.subr.bf16.mxu0 %v502
    %624 = vmatpush2.bf16.msra.mxu0 %v501
    %625 = vmatprep.subr.bf16.mxu0 %v500
    %626 = vmatpush2.bf16.msra.mxu0 %v499
    %627 = vmatprep.subr.bf16.mxu0 %v498
    %628 = vmatpush2.bf16.msra.mxu0 %v497
    %629 = vmatprep.subr.bf16.mxu0 %v496
    %630 = vmatpush2.bf16.msra.mxu0 %v495
    %631 = vmatprep.subr.bf16.mxu0 %v494
    %632 = vmatpush2.bf16.msra.mxu0 %v493
    %633 = vmatprep.subr.bf16.mxu0 %v492
    %634 = vmatpush2.bf16.msra.mxu0 %v491
    %635 = vmatprep.mubr.bf16.mxu0 %v204
    %636 = vmatmul.mubr.bf16.gmra.mxu0 %v203
    %v637 = vpop.f32.mrf.mxu0
    %v638 = vadd.f32 %v276, %v637
    %v639 = vpop.f32.mrf.mxu0
    %v640 = vadd.f32 %v280, %v639
    %v641 = vpop.f32.mrf.mxu0
    %v642 = vpop.f32.mrf.mxu0
    %643 = vdwg.mxu0
    %644 = vmatprep.subr.bf16.mxu0 %v522
    %645 = vmatpush1.bf16.msra.mxu0 %v521
    %646 = vmatprep.subr.bf16.mxu0 %v520
    %647 = vmatpush1.bf16.msra.mxu0 %v519
    %648 = vmatprep.subr.bf16.mxu0 %v518
    %649 = vmatpush1.bf16.msra.mxu0 %v517
    %650 = vmatprep.subr.bf16.mxu0 %v516
    %651 = vmatpush1.bf16.msra.mxu0 %v515
    %652 = vmatprep.subr.bf16.mxu0 %v514
    %653 = vmatpush1.bf16.msra.mxu0 %v513
    %654 = vmatprep.subr.bf16.mxu0 %v512
    %655 = vmatpush1.bf16.msra.mxu0 %v511
    %656 = vmatprep.subr.bf16.mxu0 %v510
    %657 = vmatpush1.bf16.msra.mxu0 %v509
    %658 = vmatprep.subr.bf16.mxu0 %v508
    %659 = vmatpush1.bf16.msra.mxu0 %v507
    %660 = vmatprep.subr.bf16.mxu0 %v538
    %661 = vmatpush2.bf16.msra.mxu0 %v537
    %662 = vmatprep.subr.bf16.mxu0 %v536
    %663 = vmatpush2.bf16.msra.mxu0 %v535
    %664 = vmatprep.subr.bf16.mxu0 %v534
    %665 = vmatpush2.bf16.msra.mxu0 %v533
    %666 = vmatprep.subr.bf16.mxu0 %v532
    %667 = vmatpush2.bf16.msra.mxu0 %v531
    %668 = vmatprep.subr.bf16.mxu0 %v530
    %669 = vmatpush2.bf16.msra.mxu0 %v529
    %670 = vmatprep.subr.bf16.mxu0 %v528
    %671 = vmatpush2.bf16.msra.mxu0 %v527
    %672 = vmatprep.subr.bf16.mxu0 %v526
    %673 = vmatpush2.bf16.msra.mxu0 %v525
    %674 = vmatprep.subr.bf16.mxu0 %v524
    %675 = vmatpush2.bf16.msra.mxu0 %v523
    %676 = vmatprep.mubr.bf16.mxu0 %v206
    %677 = vmatmul.mubr.bf16.gmra.mxu0 %v205
    %v678 = vpop.f32.mrf.mxu0
    %v679 = vadd.f32 %v638, %v678
    %v680 = vpop.f32.mrf.mxu0
    %v681 = vadd.f32 %v640, %v680
    %v682 = vpop.f32.mrf.mxu0
    %v683 = vpop.f32.mrf.mxu0
    %684 = vdwg.mxu0
    %v685 = vmax.f32 %v679, 0.0
    %v686 = vmax.f32 %v681, 0.0
    %v687 = vpack.c.bf16 %v685, %v685
    %v688 = vpack.c.bf16 %v686, %v686
    %v689 = vld [vmem:[%s5] sm:$0xf]
    %v690 = vld [vmem:[%s5 + $0x4] sm:$0xf]
    %v691 = vld [vmem:[%s5 + $0x8] sm:$0xf]
    %v692 = vld [vmem:[%s5 + $0xc] sm:$0xf]
    %v693 = vld [vmem:[%s5 + $0x10] sm:$0xf]
    %v694 = vld [vmem:[%s5 + $0x14] sm:$0xf]
    %v695 = vld [vmem:[%s5 + $0x18] sm:$0xf]
    %v696 = vld [vmem:[%s5 + $0x1c] sm:$0xf]
    %v697 = vld [vmem:[%s5 + $0x20] sm:$0xf]
    %v698 = vld [vmem:[%s5 + $0x24] sm:$0xf]
    %v699 = vld [vmem:[%s5 + $0x28] sm:$0xf]
    %v700 = vld [vmem:[%s5 + $0x2c] sm:$0xf]
    %v701 = vld [vmem:[%s5 + $0x30] sm:$0xf]
    %v702 = vld [vmem:[%s5 + $0x34] sm:$0xf]
    %v703 = vld [vmem:[%s5 + $0x38] sm:$0xf]
    %v704 = vld [vmem:[%s5 + $0x3c] sm:$0xf]
    %v705 = vld [vmem:[%s5 + $0x40] sm:$0xf]
    %v706 = vld [vmem:[%s5 + $0x44] sm:$0xf]
    %v707 = vld [vmem:[%s5 + $0x48] sm:$0xf]
    %v708 = vld [vmem:[%s5 + $0x4c] sm:$0xf]
    %v709 = vld [vmem:[%s5 + $0x50] sm:$0xf]
    %v710 = vld [vmem:[%s5 + $0x54] sm:$0xf]
    %v711 = vld [vmem:[%s5 + $0x58] sm:$0xf]
    %v712 = vld [vmem:[%s5 + $0x5c] sm:$0xf]
    %v713 = vld [vmem:[%s5 + $0x60] sm:$0xf]
    %v714 = vld [vmem:[%s5 + $0x64] sm:$0xf]
    %v715 = vld [vmem:[%s5 + $0x68] sm:$0xf]
    %v716 = vld [vmem:[%s5 + $0x6c] sm:$0xf]
    %v717 = vld [vmem:[%s5 + $0x70] sm:$0xf]
    %v718 = vld [vmem:[%s5 + $0x74] sm:$0xf]
    %v719 = vld [vmem:[%s5 + $0x78] sm:$0xf]
    %v720 = vld [vmem:[%s5 + $0x7c] sm:$0xf]
    %v721 = vld [vmem:[%s6] sm:$0x1]
    %v723 = vlaneseq
    %v724 = vshrl.u32 %v723, 7
    %v725 = vsub.s32 0, %v724
    %v726 = vrot.slane %v721, %v725
    %v760 = vunpack.c.l.b16 %v689
    %v761 = vunpack.c.l.b16 %v690
    %v762 = vunpack.c.l.b16 %v691
    %v763 = vunpack.c.l.b16 %v692
    %v764 = vunpack.c.l.b16 %v693
    %v765 = vunpack.c.l.b16 %v694
    %v766 = vunpack.c.l.b16 %v695
    %v767 = vunpack.c.l.b16 %v696
    %v768 = vunpack.c.l.b16 %v697
    %v769 = vunpack.c.l.b16 %v698
    %v770 = vunpack.c.l.b16 %v699
    %v771 = vunpack.c.l.b16 %v700
    %v772 = vunpack.c.l.b16 %v701
    %v773 = vunpack.c.l.b16 %v702
    %v774 = vunpack.c.l.b16 %v703
    %v775 = vunpack.c.l.b16 %v704
    %v776 = vunpack.c.l.b16 %v705
    %v777 = vunpack.c.l.b16 %v706
    %v778 = vunpack.c.l.b16 %v707
    %v779 = vunpack.c.l.b16 %v708
    %v780 = vunpack.c.l.b16 %v709
    %v781 = vunpack.c.l.b16 %v710
    %v782 = vunpack.c.l.b16 %v711
    %v783 = vunpack.c.l.b16 %v712
    %v784 = vunpack.c.l.b16 %v713
    %v785 = vunpack.c.l.b16 %v714
    %v786 = vunpack.c.l.b16 %v715
    %v787 = vunpack.c.l.b16 %v716
    %v788 = vunpack.c.l.b16 %v717
    %v789 = vunpack.c.l.b16 %v718
    %v790 = vunpack.c.l.b16 %v719
    %v791 = vunpack.c.l.b16 %v720
    %v792 = vpack.c.b16 %v761, %v760
    %v793 = vpack.c.b16 %v763, %v762
    %v794 = vpack.c.b16 %v765, %v764
    %v795 = vpack.c.b16 %v767, %v766
    %v796 = vpack.c.b16 %v769, %v768
    %v797 = vpack.c.b16 %v771, %v770
    %v798 = vpack.c.b16 %v773, %v772
    %v799 = vpack.c.b16 %v775, %v774
    %v800 = vpack.c.b16 %v777, %v776
    %v801 = vpack.c.b16 %v779, %v778
    %v802 = vpack.c.b16 %v781, %v780
    %v803 = vpack.c.b16 %v783, %v782
    %v804 = vpack.c.b16 %v785, %v784
    %v805 = vpack.c.b16 %v787, %v786
    %v806 = vpack.c.b16 %v789, %v788
    %v807 = vpack.c.b16 %v791, %v790
    %824 = vmatprep.subr.bf16.mxu0 0
    %825 = vmatpush1.bf16.msra.mxu0 %v799
    %826 = vmatprep.subr.bf16.mxu0 0
    %827 = vmatpush1.bf16.msra.mxu0 %v798
    %828 = vmatprep.subr.bf16.mxu0 0
    %829 = vmatpush1.bf16.msra.mxu0 %v797
    %830 = vmatprep.subr.bf16.mxu0 0
    %831 = vmatpush1.bf16.msra.mxu0 %v796
    %832 = vmatprep.subr.bf16.mxu0 0
    %833 = vmatpush1.bf16.msra.mxu0 %v795
    %834 = vmatprep.subr.bf16.mxu0 0
    %835 = vmatpush1.bf16.msra.mxu0 %v794
    %836 = vmatprep.subr.bf16.mxu0 0
    %837 = vmatpush1.bf16.msra.mxu0 %v793
    %838 = vmatprep.subr.bf16.mxu0 0
    %839 = vmatpush1.bf16.msra.mxu0 %v792
    %840 = vmatprep.subr.bf16.mxu0 0
    %841 = vmatpush2.bf16.msra.mxu0 %v807
    %842 = vmatprep.subr.bf16.mxu0 0
    %843 = vmatpush2.bf16.msra.mxu0 %v806
    %844 = vmatprep.subr.bf16.mxu0 0
    %845 = vmatpush2.bf16.msra.mxu0 %v805
    %846 = vmatprep.subr.bf16.mxu0 0
    %847 = vmatpush2.bf16.msra.mxu0 %v804
    %848 = vmatprep.subr.bf16.mxu0 0
    %849 = vmatpush2.bf16.msra.mxu0 %v803
    %850 = vmatprep.subr.bf16.mxu0 0
    %851 = vmatpush2.bf16.msra.mxu0 %v802
    %852 = vmatprep.subr.bf16.mxu0 0
    %853 = vmatpush2.bf16.msra.mxu0 %v801
    %854 = vmatprep.subr.bf16.mxu0 0
    %855 = vmatpush2.bf16.msra.mxu0 %v800
    %856 = vmatprep.mubr.bf16.mxu0 %v688
    %857 = vmatmul.mubr.bf16.gmra.mxu0 %v687
    %v858 = vpop.f32.mrf.mxu0
    %v859 = vadd.f32 %v726, %v858
    %v860 = vpop.f32.mrf.mxu0
    %v861 = vpop.f32.mrf.mxu0
    %v862 = vpop.f32.mrf.mxu0
    %863 = vdwg.mxu0
    %864 = vst [vmem:[#allocation5] sm:$0xff] %v859
    // Predicated region
    $region34: #{dqn_forward.1} parent=1 // pred_check
      _
    $region35: #{dqn_forward.1} parent=1 // pred_check_branch
      %866 = sbr.rel (0) target = $region37
    $region36: #{dqn_forward.1} parent=1 // pred_region
      %s868 = ssub.s32 128, 128
      %869 = vsyncadd [#allocation4], %s868
      %s871 = sshll.u32 [#allocation5], 4
      %s872 = int_to_ptr.vmem [resolvable:$true] %s871
      %874 = dma.vmem_to_hbm [thread:$0]  %s872, 128, %s7, [#allocation4]
    $region37: #{dqn_forward.1} parent=1 // pred_fallthru
      _
    // Predicated region
    $region38: #{dqn_forward.1} parent=1 // pred_check
      _
    $region39: #{dqn_forward.1} parent=1 // pred_check_branch
      %876 = sbr.rel (0) target = $region41
    $region40: #{dqn_forward.1} parent=1 // pred_region
      %877 = dma.done [#allocation4], 128
    $region41: #{dqn_forward.1} parent=1 // pred_fallthru
      _
    %878 = vsyncpa [#allocation3], 1
    %879 = vsyncpa [#allocation4], 1

</llo_original>
